<compile_context>
chip_gen: v5e
topology: v5e:2x2
jax: 0.10.0
libtpu: 0.0.40
codegen_flags: <defaults>
</compile_context>

<pallas_src>
import jax
import jax.numpy as jnp
from jax.experimental import pallas as pl
from jax.experimental.pallas import tpu as pltpu


def _round_up(x, m):
    return (x + m - 1) // m * m


def _vmem_capacity_bytes():
    """Physical VMEM of the local TPU generation (conservative fallback: 64 MiB)."""
    try:
        cap = getattr(pltpu.get_tpu_info(), "vmem_capacity_bytes", None)
        if cap:
            return int(cap)
    except Exception:
        pass
    return 64 * 1024 * 1024


def _tensorcores_per_chip():
    """v7x exposes 2 TensorCores per chip (megacore); v5e/v6e have 1."""
    try:
        if "v7" in jax.devices()[0].device_kind.lower():
            return 2
    except Exception:
        pass
    return 1


def _hier_attn_kernel(hw_ref, wb_ref, fac_ref, len_ref,      # inputs
                      ctx_ref, lse_ref, scores_ref,          # outputs
                      m_scr, l_scr, acc_scr):                # scratch
    """Grid = (batch_tiles, W).  One step == one word position for TB batch rows.

    hw_ref    : (TB, D)        query  (source @ W_word)
    wb_ref    : (1, TB, S, D)  word_bank slab for word position w (native layout)
    fac_ref   : (TB, S)        sent_align * static_attn
    len_ref   : (TB, S) i32    valid words per sentence
    ctx_ref   : (TB, D)        normalized attention context (written at last step)
    lse_ref   : (TB, 1)        log-sum-exp of the masked scores (written at last step)
    scores_ref: (1, TB, S)     raw masked scores for this word position (streamed out)
    m/l/acc   : running max / denominator / unnormalized context
    """
    w = pl.program_id(1)
    n_w = pl.num_programs(1)

    @pl.when(w == 0)
    def _init():
        m_scr[...] = jnp.full_like(m_scr, -jnp.inf)
        l_scr[...] = jnp.zeros_like(l_scr)
        acc_scr[...] = jnp.zeros_like(acc_scr)

    wb = wb_ref[0].astype(jnp.float32)                        # (TB, S, D)
    hw = hw_ref[...]                                          # (TB, D)

    # hierarchical score for word position w: word_align * sent_align * static_attn
    # (VPU multiply + lane-reduce instead of TB tiny M=1 MXU matmuls)
    s = jnp.sum(hw[:, None, :] * wb, axis=-1)                 # (TB, S)
    s = s * fac_ref[...]
    s = jnp.where(w < len_ref[...], s, -jnp.inf)              # sequence_mask
    scores_ref[0] = s                                         # stream raw scores out

    # online softmax statistics + (unnormalized) context accumulation
    m_prev = m_scr[...]                                       # (TB, 1)
    m_new = jnp.maximum(m_prev, jnp.max(s, axis=-1, keepdims=True))
    alpha = jnp.exp(m_prev - m_new)
    p = jnp.exp(s - m_new)                                    # (TB, S)
    l_scr[...] = alpha * l_scr[...] + jnp.sum(p, axis=-1, keepdims=True)
    acc_scr[...] = alpha * acc_scr[...] + jnp.sum(p[:, :, None] * wb, axis=1)
    m_scr[...] = m_new

    @pl.when(w == n_w - 1)
    def _finalize():
        inv_l = pl.reciprocal(l_scr[...], approx=True)        # EUP slot, nearly free
        ctx_ref[...] = acc_scr[...] * inv_l                   # (TB, D)
        lse_ref[...] = m_scr[...] + jnp.log(l_scr[...])       # (TB, 1)


def hierarchical_attention(source, word_bank, word_lengths, sent_bank,
                           sent_lengths, static_attn, params,
                           *, stream_dtype=jnp.float32):
    """Forward pass matching the PyTorch module (attn_type='general').

    stream_dtype: dtype used to stream word_bank through the kernel (f32 default;
    bf16 halves HBM traffic in this memory-bound kernel, accumulation stays f32).
    """
    del sent_lengths                      # unused by the reference forward
    W, B, S, D = word_bank.shape

    source = source.astype(jnp.float32)
    static_attn = static_attn.astype(jnp.float32)
    word_lengths = word_lengths.astype(jnp.int32)
    sb = jnp.transpose(sent_bank.astype(jnp.float32), (1, 0, 2))     # (B, S, D) small

    ww = params["ww"].astype(jnp.float32)                            # (D, D)
    ws = params["ws"].astype(jnp.float32)                            # (D, D)
    wo = params["wo"].astype(jnp.float32)                            # (2D, D)

    # Fused tiny projections (one (B,D)x(D,3D) matmul) + sentence-level scores.
    h_all = source @ jnp.concatenate([ww, ws, wo[D:, :]], axis=1)    # (B, 3D)
    h_word, h_sent, src_out = h_all[:, :D], h_all[:, D:2 * D], h_all[:, 2 * D:]
    factor = jnp.einsum('bd,bsd->bs', h_sent, sb) * static_attn      # (B, S)

    wb_stream = word_bank.astype(stream_dtype)
    wb_item = jnp.dtype(stream_dtype).itemsize

    # ---- generation-aware VMEM budget / limit ----
    vmem_cap = _vmem_capacity_bytes()
    if vmem_cap <= 64 * 1024 * 1024:                 # v7x-class parts (64 MiB VMEM)
        budget, vmem_limit = 18 * 1024 * 1024, 40 * 1024 * 1024
    else:                                            # v5e / v6e (128 MiB VMEM)
        budget, vmem_limit = 56 * 1024 * 1024, 96 * 1024 * 1024
    vmem_limit = min(vmem_limit, vmem_cap)

    # ---- per-batch-row VMEM footprint (padded tiles, double-buffered blocks) ----
    sub = 8 * 4 // wb_item                           # sublane packing of streamed dtype
    S_pad_in = _round_up(S, sub)
    S_pad = _round_up(S, 128)
    D_pad = _round_up(D, 128)
    per_row = (2 * S_pad_in * D_pad * wb_item        # double-buffered word_bank slab
               + 2 * _round_up(S, 8) * D_pad * 4     # in-kernel (TB,S,D) f32 temporaries
               + 2 * S_pad * 4                       # streamed raw-score output block
               + 2 * D_pad * 4 + 4 * S_pad * 4       # hw + fac + len input blocks
               + 2 * D_pad * 4 + 2 * 128 * 4         # ctx + lse output blocks
               + D_pad * 4 + 2 * 128 * 4)            # acc / m / l scratch
    cap = max(8, min(512, budget // per_row))

    multi_tc = _tensorcores_per_chip() > 1
    if multi_tc and B >= 16:
        # Ensure the "parallel" batch axis has >=2 tiles so both v7x TensorCores work.
        cap = min(cap, _round_up(-(-B // 2), 8))

    if B <= cap and not (multi_tc and B >= 16):
        nb, TB = 1, B                                # single tile: no alignment issue
    else:
        TB = max(8, (cap // 8) * 8)                  # multiple of 8 (sublane tiling)
        nb = -(-B // TB)
        TB = _round_up(-(-B // nb), 8)               # rebalance tiles, keep 8-aligned
        nb = -(-B // TB)
    B_pad = nb * TB

    pad = B_pad - B
    if pad:
        wb_stream = jnp.pad(wb_stream, ((0, 0), (0, pad), (0, 0), (0, 0)))
        h_word = jnp.pad(h_word, ((0, pad), (0, 0)))
        factor = jnp.pad(factor, ((0, pad), (0, 0)))
        word_lengths_p = jnp.pad(word_lengths, ((0, pad), (0, 0)), constant_values=1)
    else:
        word_lengths_p = word_lengths

    ctx, lse, scores = pl.pallas_call(
        _hier_attn_kernel,
        out_shape=(jax.ShapeDtypeStruct((B_pad, D), jnp.float32),        # context
                   jax.ShapeDtypeStruct((B_pad, 1), jnp.float32),        # lse
                   jax.ShapeDtypeStruct((W, B_pad, S), jnp.float32)),    # raw scores
        grid=(nb, W),
        in_specs=[
            pl.BlockSpec((TB, D), lambda i, w: (i, 0)),                  # query
            pl.BlockSpec((1, TB, S, D), lambda i, w: (w, i, 0, 0)),      # word_bank slab
            pl.BlockSpec((TB, S), lambda i, w: (i, 0)),                  # sent_align*static
            pl.BlockSpec((TB, S), lambda i, w: (i, 0)),                  # word_lengths
        ],
        out_specs=(pl.BlockSpec((TB, D), lambda i, w: (i, 0)),
                   pl.BlockSpec((TB, 1), lambda i, w: (i, 0)),
                   pl.BlockSpec((1, TB, S), lambda i, w: (w, i, 0))),
        scratch_shapes=[
            pltpu.VMEM((TB, 1), jnp.float32),   # running max
            pltpu.VMEM((TB, 1), jnp.float32),   # running denominator
            pltpu.VMEM((TB, D), jnp.float32),   # running (unnormalized) context
        ],
        compiler_params=pltpu.CompilerParams(
            dimension_semantics=("parallel", "arbitrary"),
            vmem_limit_bytes=int(vmem_limit)),
    )(h_word, wb_stream, factor, word_lengths_p)

    # Tiny XLA epilogue: softmax normalization in the reference (B, S*W) layout
    # (index = s*W + w) and the output projection + tanh.
    raw = jnp.transpose(scores[:, :B, :], (1, 2, 0))                  # (B, S, W)
    attn = (jnp.exp(raw - lse[:B].reshape(B, 1, 1)) + 1e-20).reshape(B, S * W)
    c = ctx[:B]
    attn_h = jnp.tanh(c @ wo[:D, :] + src_out)
    return attn_h, attn


def _reference(source, word_bank, word_lengths, sent_bank, static_attn, params):
    """Pure-JAX replica of the PyTorch forward (weights in (in,out) layout)."""
    W, B, S, D = word_bank.shape
    wb = jnp.transpose(word_bank, (1, 2, 0, 3)).reshape(B, S * W, D)
    sb = jnp.transpose(sent_bank, (1, 0, 2))
    h_word = source @ params["ww"]
    h_sent = source @ params["ws"]
    word_align = jnp.einsum("bd,bnd->bn", h_word, wb)                # (B, S*W)
    sent_align = jnp.einsum("bd,bsd->bs", h_sent, sb)                # (B, S)
    align = (word_align.reshape(B, S, W)
             * sent_align[:, :, None]
             * static_attn[:, :, None]).reshape(B, S * W)
    mask = (jnp.arange(W)[None, None, :] < word_lengths[:, :, None]).reshape(B, S * W)
    align = jnp.where(mask, align, -jnp.inf)
    attn = jax.nn.softmax(align, axis=-1) + 1e-20
    c = jnp.einsum("bn,bnd->bd", attn, wb)
    attn_h = jnp.tanh(jnp.concatenate([c, source], axis=-1) @ params["wo"])
    return attn_h, attn


if __name__ == "__main__":
    B, W, S, D = 2, 8, 4, 32   # batch, word_max_len, sent_count, dim
    key = jax.random.PRNGKey(0)
    ks = jax.random.split(key, 8)

    source = jax.random.normal(ks[0], (B, D), dtype=jnp.float32)
    word_bank = jax.random.normal(ks[1], (W, B, S, D), dtype=jnp.float32)
    sent_bank = jax.random.normal(ks[2], (S, B, D), dtype=jnp.float32)
    word_lengths = jax.random.randint(ks[3], (B, S), 1, W + 1, dtype=jnp.int32)
    sent_lengths = jnp.full((B,), S, dtype=jnp.int32)
    static_attn = jax.random.uniform(ks[4], (B, S), dtype=jnp.float32) + 0.1

    # Deterministic parameters (attn_type='general' => no biases), (in, out) layout.
    params = {
        "ww": jax.random.normal(ks[5], (D, D), dtype=jnp.float32) * 0.1,
        "ws": jax.random.normal(ks[6], (D, D), dtype=jnp.float32) * 0.1,
        "wo": jax.random.normal(ks[7], (2 * D, D), dtype=jnp.float32) * 0.1,
    }

    out_h, out_a = hierarchical_attention(source, word_bank, word_lengths,
                                          sent_bank, sent_lengths, static_attn,
                                          params)
    jax.block_until_ready((out_h, out_a))

    ref_h, ref_a = _reference(source, word_bank, word_lengths, sent_bank,
                              static_attn, params)
    assert out_h.shape == (B, D) and out_a.shape == (B, S * W)
    assert jnp.allclose(out_h, ref_h, atol=1e-3, rtol=1e-3), \
        float(jnp.max(jnp.abs(out_h - ref_h)))
    assert jnp.allclose(out_a, ref_a, atol=2e-5, rtol=1e-4), \
        float(jnp.max(jnp.abs(out_a - ref_a)))

    # bf16 word_bank streaming path (memory-bound win); loose tolerance vs f32 ref.
    bf_h, bf_a = hierarchical_attention(source, word_bank, word_lengths,
                                        sent_bank, sent_lengths, static_attn,
                                        params, stream_dtype=jnp.bfloat16)
    jax.block_until_ready((bf_h, bf_a))
    assert bf_h.shape == (B, D) and bf_a.shape == (B, S * W)
    assert jnp.allclose(bf_h, ref_h, atol=1e-1, rtol=1e-1)
    assert jnp.allclose(bf_a, ref_a, atol=1e-1, rtol=1e-1)

    print("KERNEL_OK")
</pallas_src>

<mosaic_0001>
module attributes {stable_mosaic.version = 11 : i64} {
  func.func @_hier_attn_kernel(%arg0: i32, %arg1: i32, %arg2: memref<2x32xf32, #tpu.memory_space<vmem>>, %arg3: memref<1x2x4x32xf32, #tpu.memory_space<vmem>>, %arg4: memref<2x4xf32, #tpu.memory_space<vmem>>, %arg5: memref<2x4xi32, #tpu.memory_space<vmem>>, %arg6: memref<2x32xf32, #tpu.memory_space<vmem>>, %arg7: memref<2x1xf32, #tpu.memory_space<vmem>>, %arg8: memref<1x2x4xf32, #tpu.memory_space<vmem>>, %arg9: memref<2x1xf32, #tpu.memory_space<vmem>>, %arg10: memref<2x1xf32, #tpu.memory_space<vmem>>, %arg11: memref<2x32xf32, #tpu.memory_space<vmem>>) attributes {dimension_semantics = [#tpu.dimension_semantics<parallel>, #tpu.dimension_semantics<arbitrary>], iteration_bounds = array<i64: 1, 8>, scalar_prefetch = 0 : i64, scratch_operands = 3 : i64, tpu.core_type = #tpu.core_type<tc>, window_params = [{transform_indices = @transform_0, window_bounds = array<i64: 2, 32>}, {transform_indices = @transform_1, window_bounds = array<i64: 1, 2, 4, 32>}, {transform_indices = @transform_2, window_bounds = array<i64: 2, 4>}, {transform_indices = @transform_3, window_bounds = array<i64: 2, 4>}, {transform_indices = @transform_4, window_bounds = array<i64: 2, 32>}, {transform_indices = @transform_5, window_bounds = array<i64: 2, 1>}, {transform_indices = @transform_6, window_bounds = array<i64: 1, 2, 4>}]} {
    %c0_i32 = arith.constant 0 : i32
    %0 = arith.cmpi eq, %arg1, %c0_i32 : i32
    %1 = arith.extui %0 : i1 to i32
    %c0_i32_0 = arith.constant 0 : i32
    %2 = arith.cmpi ne, %1, %c0_i32_0 : i32
    scf.if %2 {
      %cst_30 = arith.constant 0xFF800000 : f32
      %48 = vector.broadcast %cst_30 : f32 to vector<2x1xf32>
      %c0_31 = arith.constant 0 : index
      %c0_32 = arith.constant 0 : index
      %49 = vector.load %arg9[%c0_31, %c0_32] : memref<2x1xf32, #tpu.memory_space<vmem>>, vector<2x1xf32>
      tpu.vector_store %arg9[%c0_31, %c0_32], %48 {strides = array<i32>} : memref<2x1xf32, #tpu.memory_space<vmem>>, vector<2x1xf32>,
      %cst_33 = arith.constant 0.000000e+00 : f32
      %50 = vector.broadcast %cst_33 : f32 to vector<2x1xf32>
      %c0_34 = arith.constant 0 : index
      %c0_35 = arith.constant 0 : index
      %51 = vector.load %arg10[%c0_34, %c0_35] : memref<2x1xf32, #tpu.memory_space<vmem>>, vector<2x1xf32>
      tpu.vector_store %arg10[%c0_34, %c0_35], %50 {strides = array<i32>} : memref<2x1xf32, #tpu.memory_space<vmem>>, vector<2x1xf32>,
      %cst_36 = arith.constant 0.000000e+00 : f32
      %52 = vector.broadcast %cst_36 : f32 to vector<2x32xf32>
      %c0_37 = arith.constant 0 : index
      %c0_38 = arith.constant 0 : index
      %53 = vector.load %arg11[%c0_37, %c0_38] : memref<2x32xf32, #tpu.memory_space<vmem>>, vector<2x32xf32>
      tpu.vector_store %arg11[%c0_37, %c0_38], %52 {strides = array<i32>} : memref<2x32xf32, #tpu.memory_space<vmem>>, vector<2x32xf32>,
    } else {
    }
    %c0 = arith.constant 0 : index
    %c0_1 = arith.constant 0 : index
    %c0_2 = arith.constant 0 : index
    %c0_3 = arith.constant 0 : index
    %3 = vector.load %arg3[%c0, %c0_1, %c0_2, %c0_3] : memref<1x2x4x32xf32, #tpu.memory_space<vmem>>, vector<1x2x4x32xf32>
    %4 = vector.shape_cast %3 : vector<1x2x4x32xf32> to vector<2x4x32xf32>
    %c0_4 = arith.constant 0 : index
    %c0_5 = arith.constant 0 : index
    %5 = vector.load %arg2[%c0_4, %c0_5] : memref<2x32xf32, #tpu.memory_space<vmem>>, vector<2x32xf32>
    %6 = vector.shape_cast %5 : vector<2x32xf32> to vector<2x1x32xf32>
    %7 = vector.broadcast %6 : vector<2x1x32xf32> to vector<2x4x32xf32>
    %8 = arith.mulf %7, %4 : vector<2x4x32xf32>
    %cst = arith.constant dense<0.000000e+00> : vector<2x4xf32>
    %9 = vector.multi_reduction <add>, %8, %cst [2] : vector<2x4x32xf32> to vector<2x4xf32>
    %c0_6 = arith.constant 0 : index
    %c0_7 = arith.constant 0 : index
    %10 = vector.load %arg4[%c0_6, %c0_7] : memref<2x4xf32, #tpu.memory_space<vmem>>, vector<2x4xf32>
    %11 = arith.mulf %9, %10 : vector<2x4xf32>
    %c0_8 = arith.constant 0 : index
    %c0_9 = arith.constant 0 : index
    %12 = vector.load %arg5[%c0_8, %c0_9] : memref<2x4xi32, #tpu.memory_space<vmem>>, vector<2x4xi32>
    %13 = vector.broadcast %arg1 : i32 to vector<2x4xi32>
    %14 = arith.cmpi slt, %13, %12 : vector<2x4xi32>
    %cst_10 = arith.constant 0xFF800000 : f32
    %15 = vector.broadcast %cst_10 : f32 to vector<2x4xf32>
    %16 = arith.select %14, %11, %15 : vector<2x4xi1>, vector<2x4xf32>
    %c0_11 = arith.constant 0 : index
    %c0_12 = arith.constant 0 : index
    %c0_13 = arith.constant 0 : index
    %17 = vector.load %arg8[%c0_11, %c0_12, %c0_13] : memref<1x2x4xf32, #tpu.memory_space<vmem>>, vector<1x2x4xf32>
    %18 = vector.shape_cast %17 : vector<1x2x4xf32> to vector<2x4xf32>
    %19 = vector.shape_cast %16 : vector<2x4xf32> to vector<1x2x4xf32>
    tpu.vector_store %arg8[%c0_11, %c0_12, %c0_13], %19 {strides = array<i32>} : memref<1x2x4xf32, #tpu.memory_space<vmem>>, vector<1x2x4xf32>,
    %c0_14 = arith.constant 0 : index
    %c0_15 = arith.constant 0 : index
    %20 = vector.load %arg9[%c0_14, %c0_15] : memref<2x1xf32, #tpu.memory_space<vmem>>, vector<2x1xf32>
    %cst_16 = arith.constant dense<0xFF800000> : vector<2xf32>
    %21 = vector.multi_reduction <maximumf>, %16, %cst_16 [1] : vector<2x4xf32> to vector<2xf32>
    %22 = vector.shape_cast %21 : vector<2xf32> to vector<2x1xf32>
    %23 = arith.maximumf %20, %22 : vector<2x1xf32>
    %24 = arith.subf %20, %23 : vector<2x1xf32>
    %25 = math.exp %24 : vector<2x1xf32>
    %26 = vector.broadcast %23 : vector<2x1xf32> to vector<2x4xf32>
    %27 = arith.subf %16, %26 : vector<2x4xf32>
    %28 = math.exp %27 : vector<2x4xf32>
    %c0_17 = arith.constant 0 : index
    %c0_18 = arith.constant 0 : index
    %29 = vector.load %arg10[%c0_17, %c0_18] : memref<2x1xf32, #tpu.memory_space<vmem>>, vector<2x1xf32>
    %30 = arith.mulf %25, %29 : vector<2x1xf32>
    %cst_19 = arith.constant dense<0.000000e+00> : vector<2xf32>
    %31 = vector.multi_reduction <add>, %28, %cst_19 [1] : vector<2x4xf32> to vector<2xf32>
    %32 = vector.shape_cast %31 : vector<2xf32> to vector<2x1xf32>
    %33 = arith.addf %30, %32 : vector<2x1xf32>
    %c0_20 = arith.constant 0 : index
    %c0_21 = arith.constant 0 : index
    %34 = vector.load %arg10[%c0_20, %c0_21] : memref<2x1xf32, #tpu.memory_space<vmem>>, vector<2x1xf32>
    tpu.vector_store %arg10[%c0_20, %c0_21], %33 {strides = array<i32>} : memref<2x1xf32, #tpu.memory_space<vmem>>, vector<2x1xf32>,
    %c0_22 = arith.constant 0 : index
    %c0_23 = arith.constant 0 : index
    %35 = vector.load %arg11[%c0_22, %c0_23] : memref<2x32xf32, #tpu.memory_space<vmem>>, vector<2x32xf32>
    %36 = vector.broadcast %25 : vector<2x1xf32> to vector<2x32xf32>
    %37 = arith.mulf %36, %35 : vector<2x32xf32>
    %38 = vector.shape_cast %28 : vector<2x4xf32> to vector<2x4x1xf32>
    %39 = vector.broadcast %38 : vector<2x4x1xf32> to vector<2x4x32xf32>
    %40 = arith.mulf %39, %4 : vector<2x4x32xf32>
    %cst_24 = arith.constant dense<0.000000e+00> : vector<2x32xf32>
    %41 = vector.multi_reduction <add>, %40, %cst_24 [1] : vector<2x4x32xf32> to vector<2x32xf32>
    %42 = arith.addf %37, %41 : vector<2x32xf32>
    %c0_25 = arith.constant 0 : index
    %c0_26 = arith.constant 0 : index
    %43 = vector.load %arg11[%c0_25, %c0_26] : memref<2x32xf32, #tpu.memory_space<vmem>>, vector<2x32xf32>
    tpu.vector_store %arg11[%c0_25, %c0_26], %42 {strides = array<i32>} : memref<2x32xf32, #tpu.memory_space<vmem>>, vector<2x32xf32>,
    %c0_27 = arith.constant 0 : index
    %c0_28 = arith.constant 0 : index
    %44 = vector.load %arg9[%c0_27, %c0_28] : memref<2x1xf32, #tpu.memory_space<vmem>>, vector<2x1xf32>
    tpu.vector_store %arg9[%c0_27, %c0_28], %23 {strides = array<i32>} : memref<2x1xf32, #tpu.memory_space<vmem>>, vector<2x1xf32>,
    %c7_i32 = arith.constant 7 : i32
    %45 = arith.cmpi eq, %arg1, %c7_i32 : i32
    %46 = arith.extui %45 : i1 to i32
    %c0_i32_29 = arith.constant 0 : i32
    %47 = arith.cmpi ne, %46, %c0_i32_29 : i32
    scf.if %47 {
      %c0_30 = arith.constant 0 : index
      %c0_31 = arith.constant 0 : index
      %48 = vector.load %arg10[%c0_30, %c0_31] : memref<2x1xf32, #tpu.memory_space<vmem>>, vector<2x1xf32>
      %49 = tpu.reciprocal %48 {approx = true} : vector<2x1xf32> -> vector<2x1xf32>
      %c0_32 = arith.constant 0 : index
      %c0_33 = arith.constant 0 : index
      %50 = vector.load %arg11[%c0_32, %c0_33] : memref<2x32xf32, #tpu.memory_space<vmem>>, vector<2x32xf32>
      %51 = vector.broadcast %49 : vector<2x1xf32> to vector<2x32xf32>
      %52 = arith.mulf %50, %51 : vector<2x32xf32>
      %c0_34 = arith.constant 0 : index
      %c0_35 = arith.constant 0 : index
      %53 = vector.load %arg6[%c0_34, %c0_35] : memref<2x32xf32, #tpu.memory_space<vmem>>, vector<2x32xf32>
      tpu.vector_store %arg6[%c0_34, %c0_35], %52 {strides = array<i32>} : memref<2x32xf32, #tpu.memory_space<vmem>>, vector<2x32xf32>,
      %c0_36 = arith.constant 0 : index
      %c0_37 = arith.constant 0 : index
      %54 = vector.load %arg9[%c0_36, %c0_37] : memref<2x1xf32, #tpu.memory_space<vmem>>, vector<2x1xf32>
      %c0_38 = arith.constant 0 : index
      %c0_39 = arith.constant 0 : index
      %55 = vector.load %arg10[%c0_38, %c0_39] : memref<2x1xf32, #tpu.memory_space<vmem>>, vector<2x1xf32>
      %56 = math.log %55 : vector<2x1xf32>
      %57 = arith.addf %54, %56 : vector<2x1xf32>
      %c0_40 = arith.constant 0 : index
      %c0_41 = arith.constant 0 : index
      %58 = vector.load %arg7[%c0_40, %c0_41] : memref<2x1xf32, #tpu.memory_space<vmem>>, vector<2x1xf32>
      tpu.vector_store %arg7[%c0_40, %c0_41], %57 {strides = array<i32>} : memref<2x1xf32, #tpu.memory_space<vmem>>, vector<2x1xf32>,
    } else {
    }
    return
  }
  func.func @transform_0(%arg0: i32, %arg1: i32) -> (i32, i32) {
    %c0_i32 = arith.constant 0 : i32
    %c0_i32_0 = arith.constant 0 : i32
    return %arg0, %c0_i32 : i32, i32
  }
  func.func @transform_1(%arg0: i32, %arg1: i32) -> (i32, i32, i32, i32) {
    %c0_i32 = arith.constant 0 : i32
    %c0_i32_0 = arith.constant 0 : i32
    %c0_i32_1 = arith.constant 0 : i32
    return %arg1, %arg0, %c0_i32, %c0_i32_0 : i32, i32, i32, i32
  }
  func.func @transform_2(%arg0: i32, %arg1: i32) -> (i32, i32) {
    %c0_i32 = arith.constant 0 : i32
    %c0_i32_0 = arith.constant 0 : i32
    return %arg0, %c0_i32 : i32, i32
  }
  func.func @transform_3(%arg0: i32, %arg1: i32) -> (i32, i32) {
    %c0_i32 = arith.constant 0 : i32
    %c0_i32_0 = arith.constant 0 : i32
    return %arg0, %c0_i32 : i32, i32
  }
  func.func @transform_4(%arg0: i32, %arg1: i32) -> (i32, i32) {
    %c0_i32 = arith.constant 0 : i32
    %c0_i32_0 = arith.constant 0 : i32
    return %arg0, %c0_i32 : i32, i32
  }
  func.func @transform_5(%arg0: i32, %arg1: i32) -> (i32, i32) {
    %c0_i32 = arith.constant 0 : i32
    %c0_i32_0 = arith.constant 0 : i32
    return %arg0, %c0_i32 : i32, i32
  }
  func.func @transform_6(%arg0: i32, %arg1: i32) -> (i32, i32, i32) {
    %c0_i32 = arith.constant 0 : i32
    %c0_i32_0 = arith.constant 0 : i32
    return %arg1, %arg0, %c0_i32 : i32, i32, i32
  }
}

</mosaic_0001>

<llo_original>
// kernel: tpu_custom_call.1
$region0: #{tpu_custom_call.1}
  #allocation0 [shape = 'u32[]', space=smem, size = 0x4, offset = 0x4, fixed_abs, tag = 'smem constant byte address 0x4 - core index']
  #allocation1 [shape = 'u32[72,128]{1,0:T(1,128)}', space=vmem, size = 0x9000, scoped, tag = 'internal scratch']
  #allocation2 [shape = 'f32[2,1]{1,0:T(2,128)}', space=vmem, size = 0x400, scoped, tag = 'scratch operand']
  #allocation3 [shape = 'f32[2,1]{1,0:T(2,128)}', space=vmem, size = 0x400, scoped, tag = 'scratch operand']
  #allocation4 [shape = 'f32[2,32]{1,0:T(2,128)}', space=vmem, size = 0x400, scoped, tag = 'scratch operand']
  %s0 = inlined_call_operand.hbm [shape: f32[2,32], index: 0, kind: input, shape index: {}]
  %s1 = inlined_call_operand.hbm [shape: f32[8,2,4,32], index: 1, kind: input, shape index: {}]
  %s2 = inlined_call_operand.hbm [shape: f32[2,4], index: 2, kind: input, shape index: {}]
  %s3 = inlined_call_operand.vmem [shape: s32[2,4], index: 3, kind: input, shape index: {}]
  %s4 = inlined_call_operand.hbm [shape: f32[2,32], index: 4, kind: output, shape index: {0}]
  %s5 = inlined_call_operand.vmem [shape: f32[2,1], index: 5, kind: output, shape index: {1}]
  %s6 = inlined_call_operand.vmem [shape: f32[8,2,4], index: 6, kind: output, shape index: {2}]
  %7 = xla_tuple %s4, %s5, %s6
  %s8 = sld [smem:[#allocation0]]
  $region85: #{tpu_custom_call.1} parent=0
    _
  %s10 = ssub.s32 1, %s8
  %s11 = scalar_select 0, %s10, %s8
  $region1: #{tpu_custom_call.1} parent=0
    #allocation5 [shape = 'u8[1024]{0}', space=vmem, size = 0x400, scoped, tag = 'input window, operand 0, single buffered']
    #allocation6 [shape = 's32[2]{0}', space=sflag, size = 0x8, scoped, tag = 'scoped memory for tpu_custom_call.1']
    #allocation7 [shape = 's32[2]{0}', space=sflag, size = 0x8, scoped, tag = 'scoped memory for tpu_custom_call.1']
    #allocation8 [shape = 'u8[8192]{0}', space=vmem, size = 0x2000, scoped, tag = 'input window, operand 1']
    #allocation9 [shape = 's32[2]{0}', space=sflag, size = 0x8, scoped, tag = 'scoped memory for tpu_custom_call.1']
    #allocation10 [shape = 'u8[1024]{0}', space=vmem, size = 0x400, scoped, tag = 'input window, operand 2, single buffered']
    #allocation11 [shape = 'u8[1024]{0}', space=vmem, size = 0x400, scoped, tag = 'output window, operand 0, single buffered']
    %12 = vsyncpa [#allocation6], 0
    %13 = vsyncpa [#allocation9], 0
    %s14 = scalar_lea.sflag [#allocation9], 1
    %15 = vsyncpa %s14, 0
    %16 = vsyncpa [#allocation7], 0
    loop: start=0, step=1, limit=10
    $region2: #{tpu_custom_call.1} parent=1 // loop_pre_header
      _
    $region3: #{tpu_custom_call.1} parent=1 // loop_header
      %s18 = sphi 0, %s22
      %p19 = scmp.ge.s32.totalorder %s18, 10
      %s25 = sphi 0, %s37
      %s26 = sphi 0, %s33
      %s27 = sphi 0, %s25
      %s28 = sphi 0, %s26
      %s29 = sphi 0, %s27
      %s30 = sphi 0, %s28
      %s40 = sphi 0, %s42
      %s43 = sphi 0, %s40
      %s44 = sphi 0, %s43
      %s60 = sphi 0, %s44
      %s68 = sphi 0, %s70
      %s71 = sphi 0, %s68
      %s72 = sphi 0, %s71
      %s88 = sphi 0, %s72
      %s94 = sphi 0, %s96
      %s97 = sphi 0, %s94
      %s98 = sphi 0, %s97
      %s114 = sphi 0, %s98
      %s120 = sphi 0, %s122
      %s123 = sphi 0, %s120
      %s124 = sphi 0, %s123
      %s140 = sphi 0, %s124
      %s146 = sphi 0, %s148
      %s149 = sphi 0, %s146
      %s150 = sphi 0, %s149
      %s166 = sphi 0, %s150
      %s172 = sphi 0, %s174
      %s175 = sphi 0, %s172
      %s176 = sphi 0, %s175
      %s192 = sphi 0, %s176
      %s200 = sphi 0, %s202
      %s203 = sphi 0, %s200
      %s204 = sphi 0, %s203
      %s220 = sphi 0, %s204
    $region4: #{tpu_custom_call.1} parent=1 // loop_header_branch
      %21 = sbr.rel (%p19) target = $region8
    $region5: #{tpu_custom_call.1} parent=1 // loop_body
      %s23 = ssub.s32 %s18, 1
      %s24 = ssub.s32 %s18, 2
      %s31 = sadd.s32 1, %s26
      %p32 = scmp.ge.s32.totalorder %s31, 8
      %s33 = scalar_select %p32, 0, %s31
      %s34 = sadd.s32 1, %s25
      %s35 = scalar_select %p32, %s34, %s25
      %p36 = scmp.ge.s32.totalorder %s35, 1
      %s37 = scalar_select %p36, 0, %s35
      %s38 = ssub.s32 %s25, %s37
      %p39 = scmp.eq.s32.totalorder %s38, 0
      %s41 = sadd.s32 %s40, 1
      %s42 = scalar_select %p39, %s40, %s41
      %p45 = pneg %p39
      %p46 = scmp.eq.s32.totalorder %s18, 7
      %p47 = por %p45, %p46
      %p48 = scmp.ne.s32.totalorder %s40, %s43
      %p49 = scmp.eq.s32.totalorder %s18, 0
      %p50 = por %p48, %p49
      %p51 = scmp.ne.s32.totalorder %s40, %s43
      %p52 = scmp.eq.s32.totalorder %s23, 7
      %p53 = por %p51, %p52
      %p54 = scmp.ne.s32.totalorder %s43, %s44
      %p55 = scmp.eq.s32.totalorder %s23, 0
      %p56 = por %p54, %p55
      %p57 = scmp.ne.s32.totalorder %s43, %s44
      %p58 = scmp.eq.s32.totalorder %s24, 7
      %p59 = por %p57, %p58
      %p61 = scmp.ne.s32.totalorder %s44, %s60
      %p62 = scmp.eq.s32.totalorder %s24, 0
      %p63 = por %p61, %p62
      %s64 = ssub.s32 %s26, %s33
      %s65 = ssub.s32 %s25, %s37
      %s66 = sor.u32 %s64, %s65
      %p67 = scmp.eq.s32.totalorder %s66, 0
      %s69 = sadd.s32 %s68, 1
      %s70 = scalar_select %p67, %s68, %s69
      %p73 = pneg %p67
      %p74 = scmp.eq.s32.totalorder %s18, 7
      %p75 = por %p73, %p74
      %p76 = scmp.ne.s32.totalorder %s68, %s71
      %p77 = scmp.eq.s32.totalorder %s18, 0
      %p78 = por %p76, %p77
      %p79 = scmp.ne.s32.totalorder %s68, %s71
      %p80 = scmp.eq.s32.totalorder %s23, 7
      %p81 = por %p79, %p80
      %p82 = scmp.ne.s32.totalorder %s71, %s72
      %p83 = scmp.eq.s32.totalorder %s23, 0
      %p84 = por %p82, %p83
      %p85 = scmp.ne.s32.totalorder %s71, %s72
      %p86 = scmp.eq.s32.totalorder %s24, 7
      %p87 = por %p85, %p86
      %p89 = scmp.ne.s32.totalorder %s72, %s88
      %p90 = scmp.eq.s32.totalorder %s24, 0
      %p91 = por %p89, %p90
      %s92 = ssub.s32 %s25, %s37
      %p93 = scmp.eq.s32.totalorder %s92, 0
      %s95 = sadd.s32 %s94, 1
      %s96 = scalar_select %p93, %s94, %s95
      %p99 = pneg %p93
      %p100 = scmp.eq.s32.totalorder %s18, 7
      %p101 = por %p99, %p100
      %p102 = scmp.ne.s32.totalorder %s94, %s97
      %p103 = scmp.eq.s32.totalorder %s18, 0
      %p104 = por %p102, %p103
      %p105 = scmp.ne.s32.totalorder %s94, %s97
      %p106 = scmp.eq.s32.totalorder %s23, 7
      %p107 = por %p105, %p106
      %p108 = scmp.ne.s32.totalorder %s97, %s98
      %p109 = scmp.eq.s32.totalorder %s23, 0
      %p110 = por %p108, %p109
      %p111 = scmp.ne.s32.totalorder %s97, %s98
      %p112 = scmp.eq.s32.totalorder %s24, 7
      %p113 = por %p111, %p112
      %p115 = scmp.ne.s32.totalorder %s98, %s114
      %p116 = scmp.eq.s32.totalorder %s24, 0
      %p117 = por %p115, %p116
      %s118 = ssub.s32 %s25, %s37
      %p119 = scmp.eq.s32.totalorder %s118, 0
      %s121 = sadd.s32 %s120, 1
      %s122 = scalar_select %p119, %s120, %s121
      %p125 = pneg %p119
      %p126 = scmp.eq.s32.totalorder %s18, 7
      %p127 = por %p125, %p126
      %p128 = scmp.ne.s32.totalorder %s120, %s123
      %p129 = scmp.eq.s32.totalorder %s18, 0
      %p130 = por %p128, %p129
      %p131 = scmp.ne.s32.totalorder %s120, %s123
      %p132 = scmp.eq.s32.totalorder %s23, 7
      %p133 = por %p131, %p132
      %p134 = scmp.ne.s32.totalorder %s123, %s124
      %p135 = scmp.eq.s32.totalorder %s23, 0
      %p136 = por %p134, %p135
      %p137 = scmp.ne.s32.totalorder %s123, %s124
      %p138 = scmp.eq.s32.totalorder %s24, 7
      %p139 = por %p137, %p138
      %p141 = scmp.ne.s32.totalorder %s124, %s140
      %p142 = scmp.eq.s32.totalorder %s24, 0
      %p143 = por %p141, %p142
      %s144 = ssub.s32 %s25, %s37
      %p145 = scmp.eq.s32.totalorder %s144, 0
      %s147 = sadd.s32 %s146, 1
      %s148 = scalar_select %p145, %s146, %s147
      %p151 = pneg %p145
      %p152 = scmp.eq.s32.totalorder %s18, 7
      %p153 = por %p151, %p152
      %p154 = scmp.ne.s32.totalorder %s146, %s149
      %p155 = scmp.eq.s32.totalorder %s18, 0
      %p156 = por %p154, %p155
      %p157 = scmp.ne.s32.totalorder %s146, %s149
      %p158 = scmp.eq.s32.totalorder %s23, 7
      %p159 = por %p157, %p158
      %p160 = scmp.ne.s32.totalorder %s149, %s150
      %p161 = scmp.eq.s32.totalorder %s23, 0
      %p162 = por %p160, %p161
      %p163 = scmp.ne.s32.totalorder %s149, %s150
      %p164 = scmp.eq.s32.totalorder %s24, 7
      %p165 = por %p163, %p164
      %p167 = scmp.ne.s32.totalorder %s150, %s166
      %p168 = scmp.eq.s32.totalorder %s24, 0
      %p169 = por %p167, %p168
      %s170 = ssub.s32 %s25, %s37
      %p171 = scmp.eq.s32.totalorder %s170, 0
      %s173 = sadd.s32 %s172, 1
      %s174 = scalar_select %p171, %s172, %s173
      %p177 = pneg %p171
      %p178 = scmp.eq.s32.totalorder %s18, 7
      %p179 = por %p177, %p178
      %p180 = scmp.ne.s32.totalorder %s172, %s175
      %p181 = scmp.eq.s32.totalorder %s18, 0
      %p182 = por %p180, %p181
      %p183 = scmp.ne.s32.totalorder %s172, %s175
      %p184 = scmp.eq.s32.totalorder %s23, 7
      %p185 = por %p183, %p184
      %p186 = scmp.ne.s32.totalorder %s175, %s176
      %p187 = scmp.eq.s32.totalorder %s23, 0
      %p188 = por %p186, %p187
      %p189 = scmp.ne.s32.totalorder %s175, %s176
      %p190 = scmp.eq.s32.totalorder %s24, 7
      %p191 = por %p189, %p190
      %p193 = scmp.ne.s32.totalorder %s176, %s192
      %p194 = scmp.eq.s32.totalorder %s24, 0
      %p195 = por %p193, %p194
      %s196 = ssub.s32 %s26, %s33
      %s197 = ssub.s32 %s25, %s37
      %s198 = sor.u32 %s196, %s197
      %p199 = scmp.eq.s32.totalorder %s198, 0
      %s201 = sadd.s32 %s200, 1
      %s202 = scalar_select %p199, %s200, %s201
      %p205 = pneg %p199
      %p206 = scmp.eq.s32.totalorder %s18, 7
      %p207 = por %p205, %p206
      %p208 = scmp.ne.s32.totalorder %s200, %s203
      %p209 = scmp.eq.s32.totalorder %s18, 0
      %p210 = por %p208, %p209
      %p211 = scmp.ne.s32.totalorder %s200, %s203
      %p212 = scmp.eq.s32.totalorder %s23, 7
      %p213 = por %p211, %p212
      %p214 = scmp.ne.s32.totalorder %s203, %s204
      %p215 = scmp.eq.s32.totalorder %s23, 0
      %p216 = por %p214, %p215
      %p217 = scmp.ne.s32.totalorder %s203, %s204
      %p218 = scmp.eq.s32.totalorder %s24, 7
      %p219 = por %p217, %p218
      %p221 = scmp.ne.s32.totalorder %s204, %s220
      %p222 = scmp.eq.s32.totalorder %s24, 0
      %p223 = por %p221, %p222
      %p224 = scmp.le.s32.totalorder 1, %s18
      %p225 = scmp.lt.s32.totalorder %s18, 9
      %p226 = pnand %p224, %p225
      %p227 = pneg %p226
      // Predicated region
      $region9: #{tpu_custom_call.1} parent=5 // pred_check
        _
      $region10: #{tpu_custom_call.1} parent=5 // pred_check_branch
        %229 = sbr.rel (%p226) target = $region12
      $region11: #{tpu_custom_call.1} parent=5 // pred_region
        %s230 = ssub.s32 %s18, 1
        // Predicated region
        $region13: #{tpu_custom_call.1} parent=11 // pred_check
          %p231 = pneg %p56
        $region14: #{tpu_custom_call.1} parent=11 // pred_check_branch
          %233 = sbr.rel (%p231) target = $region16
        $region15: #{tpu_custom_call.1} parent=11 // pred_region
          %235 = vsyncadd [#allocation6], 0
          %s236 = smul.addr %s27, 2
          %s237 = scalar_lea.hbm %s0, %s236
          %s239 = sshll.u32 %s237, 4
          %s240 = int_to_ptr.hbm [resolvable:$true] %s239
          %s241 = sshll.u32 [#allocation5], 4
          %s242 = int_to_ptr.vmem [resolvable:$true] %s241
          %244 = dma.hbm_to_vmem [thread:$0]  %s240, 32, %s242, [#allocation6]
        $region16: #{tpu_custom_call.1} parent=11 // pred_fallthru
          _
        // Predicated region
        $region17: #{tpu_custom_call.1} parent=11 // pred_check
          %p245 = pneg %p110
        $region18: #{tpu_custom_call.1} parent=11 // pred_check_branch
          %247 = sbr.rel (%p245) target = $region20
        $region19: #{tpu_custom_call.1} parent=11 // pred_region
          %249 = vsyncadd [#allocation9], 0
          %s250 = smul.addr %s27, 2
          %s251 = scalar_lea.hbm %s2, %s250
          %s253 = sshll.u32 %s251, 4
          %s254 = int_to_ptr.hbm [resolvable:$true] %s253
          %s255 = sshll.u32 [#allocation10], 4
          %s256 = int_to_ptr.vmem [resolvable:$true] %s255
          %258 = dma.hbm_to_vmem [thread:$0]  %s254, 32, %s256, [#allocation9]
        $region20: #{tpu_custom_call.1} parent=11 // pred_fallthru
          _
        // Predicated region
        $region21: #{tpu_custom_call.1} parent=11 // pred_check
          %p259 = pneg %p136
        $region22: #{tpu_custom_call.1} parent=11 // pred_check_branch
          %261 = sbr.rel (%p259) target = $region24
        $region23: #{tpu_custom_call.1} parent=11 // pred_region
          %p262 = scmp.lt.s32.totalorder %s27, 0
          %s263 = scalar_select %p262, %s27, 0
          %s264 = smul.addr %s263, 2
          %s265 = scalar_lea.vmem %s3, %s264
        $region24: #{tpu_custom_call.1} parent=11 // pred_fallthru
          _
      $region12: #{tpu_custom_call.1} parent=5 // pred_fallthru
        _
      %p266 = scmp.lt.s32.totalorder %s18, 8
      // Predicated region
      $region25: #{tpu_custom_call.1} parent=5 // pred_check
        %p267 = pneg %p266
      $region26: #{tpu_custom_call.1} parent=5 // pred_check_branch
        %269 = sbr.rel (%p267) target = $region28
      $region27: #{tpu_custom_call.1} parent=5 // pred_region
        // Predicated region
        $region29: #{tpu_custom_call.1} parent=27 // pred_check
          %p270 = pneg %p78
        $region30: #{tpu_custom_call.1} parent=27 // pred_check_branch
          %272 = sbr.rel (%p270) target = $region32
        $region31: #{tpu_custom_call.1} parent=27 // pred_region
          %s273 = sand.u32 %s18, 1
          %s274 = scalar_lea.sflag [#allocation9], %s273
          %s275 = sand.u32 %s68, 1
          %s276 = smul.addr %s275, 8
          %s277 = scalar_lea.vmem [#allocation8], %s276
          %s278 = smul.u32 2, %s25
          %280 = vsyncadd %s274, 0
          %s281 = smul.addr %s26, 2
          %s282 = sadd.s32 %s278, %s281
          %s283 = smul.addr %s282, 4
          %s284 = scalar_lea.hbm %s1, %s283
          %s285 = sshll.u32 %s284, 4
          %s286 = int_to_ptr.hbm [resolvable:$true] %s285
          %s287 = sshll.u32 %s277, 4
          %s288 = int_to_ptr.vmem [resolvable:$true] %s287
          %293 = dma.hbm_to_vmem [thread:$0]  %s286, 128, %s288, %s274, 64, 64, 4
        $region32: #{tpu_custom_call.1} parent=27 // pred_fallthru
          _
      $region28: #{tpu_custom_call.1} parent=5 // pred_fallthru
        _
      %p294 = scmp.le.s32.totalorder 1, %s18
      %p295 = scmp.lt.s32.totalorder %s18, 9
      %p296 = pnand %p294, %p295
      %p297 = pneg %p296
      // Predicated region
      $region33: #{tpu_custom_call.1} parent=5 // pred_check
        _
      $region34: #{tpu_custom_call.1} parent=5 // pred_check_branch
        %299 = sbr.rel (%p296) target = $region36
      $region35: #{tpu_custom_call.1} parent=5 // pred_region
        %s300 = ssub.s32 %s18, 1
        // Predicated region
        $region37: #{tpu_custom_call.1} parent=35 // pred_check
          %p301 = pneg %p56
        $region38: #{tpu_custom_call.1} parent=35 // pred_check_branch
          %303 = sbr.rel (%p301) target = $region40
        $region39: #{tpu_custom_call.1} parent=35 // pred_region
          %305 = dma.done [#allocation6], 32
        $region40: #{tpu_custom_call.1} parent=35 // pred_fallthru
          _
        %s306 = sand.u32 %s23, 1
        %s307 = scalar_lea.sflag [#allocation9], %s306
        %s308 = sand.u32 %s71, 1
        %s309 = smul.addr %s308, 8
        %s310 = scalar_lea.vmem [#allocation8], %s309
        // Predicated region
        $region41: #{tpu_custom_call.1} parent=35 // pred_check
          %p311 = pneg %p84
        $region42: #{tpu_custom_call.1} parent=35 // pred_check_branch
          %313 = sbr.rel (%p311) target = $region44
        $region43: #{tpu_custom_call.1} parent=35 // pred_region
          %315 = dma.done %s307, 128
        $region44: #{tpu_custom_call.1} parent=35 // pred_fallthru
          _
        // Predicated region
        $region45: #{tpu_custom_call.1} parent=35 // pred_check
          %p316 = pneg %p110
        $region46: #{tpu_custom_call.1} parent=35 // pred_check_branch
          %318 = sbr.rel (%p316) target = $region48
        $region47: #{tpu_custom_call.1} parent=35 // pred_region
          %320 = dma.done [#allocation9], 32
        $region48: #{tpu_custom_call.1} parent=35 // pred_fallthru
          _
        %p321 = pneg %p56
        %p322 = pneg %p53
        %s323 = sand.u32 %s23, 1
        %s324 = scalar_lea.sflag [#allocation9], %s323
        %s325 = sand.u32 %s71, 1
        %s326 = smul.addr %s325, 8
        %s327 = scalar_lea.vmem [#allocation8], %s326
        %p328 = pneg %p84
        %p329 = pneg %p81
        %p330 = pneg %p110
        %p331 = pneg %p107
        %p332 = scmp.lt.s32.totalorder %s27, 0
        %s333 = scalar_select %p332, %s27, 0
        %s334 = smul.addr %s333, 2
        %s335 = scalar_lea.vmem %s3, %s334
        %p336 = pneg %p136
        %p337 = pneg %p133
        %p338 = pneg %p162
        %p339 = pneg %p159
        %p340 = pneg %p188
        %p341 = pneg %p185
        %p342 = scmp.lt.s32.totalorder %s27, 0
        %s343 = scalar_select %p342, %s27, 0
        %s344 = smul.addr %s343, 2
        %s345 = scalar_lea.vmem %s5, %s344
        %p346 = pneg %p216
        %p347 = pneg %p213
        %p348 = scmp.lt.s32.totalorder %s28, 7
        %s349 = scalar_select %p348, %s28, 7
        %p350 = scmp.lt.s32.totalorder %s27, 0
        %s351 = scalar_select %p350, %s27, 0
        %s352 = sadd.s32 %s351, %s349
        %s353 = smul.addr %s352, 2
        %s354 = scalar_lea.vmem %s6, %s353
        %s355 = smul.u32 2, %s27
        %p356 = scmp.lt.s32.totalorder %s27, 0
        %s357 = scalar_select %p356, %s27, 0
        %s358 = smul.addr %s357, 2
        %s359 = scalar_lea.vmem %s3, %s358
        %p360 = scmp.lt.s32.totalorder %s27, 0
        %s361 = scalar_select %p360, %s27, 0
        %s362 = smul.addr %s361, 2
        %s363 = scalar_lea.vmem %s5, %s362
        %p364 = scmp.lt.s32.totalorder %s28, 7
        %s365 = scalar_select %p364, %s28, 7
        %p366 = scmp.lt.s32.totalorder %s27, 0
        %s367 = scalar_select %p366, %s27, 0
        %s368 = sadd.s32 %s367, %s365
        %s369 = smul.addr %s368, 2
        %s370 = scalar_lea.vmem %s6, %s369
        %p371 = scmp.eq.s32.totalorder %s28, 0
        // Predicated region
        $region49: #{tpu_custom_call.1} parent=35 // pred_check
          %p372 = pneg %p371
        $region50: #{tpu_custom_call.1} parent=35 // pred_check_branch
          %374 = sbr.rel (%p372) target = $region52
        $region51: #{tpu_custom_call.1} parent=35 // pred_region
          %vm375 = vcmask 1024
          %376 = vst.msk [vmem:[#allocation2] sm:$0x3] %vm375, -inf
          %377 = vst.msk [vmem:[#allocation3] sm:$0x3] %vm375, 0.0
          %vm378 = vcmask 254976
          %379 = vst.msk [vmem:[#allocation4] sm:$0x3] %vm378, 0.0
        $region52: #{tpu_custom_call.1} parent=35 // pred_fallthru
          _
        %v380 = vld [vmem:[%s310] sm:$0xf]
        %v381 = vld [vmem:[%s310 + $0x4] sm:$0xf]
        %v382 = vld [vmem:[#allocation5] sm:$0x3]
        %v384 = vrot.slane %v382, 1
        %v385 = vperm.slane %v382, 0
        %v386 = vperm.slane %v384, 0
        %v389 = vmul.f32 %v385, %v380
        %v390 = vmul.f32 %v386, %v381
        %vm391 = vcmask 257024
        %v392 = vsel %vm391, %v389, 0.0
        %393 = vadd.xlane.f32.xlu0 %v392
        %v394 = vpop.xlane.xlu0 %393
        %v395 = vsel %vm391, %v390, 0.0
        %396 = vadd.xlane.f32.xlu0 %v395
        %v397 = vpop.xlane.xlu0 %396
        %v398 = vld [vmem:[#allocation10] sm:$0x3]
        %v400 = vperm.slane %v398, 0
        %v401 = vlaneseq
        %v402 = vshrl.u32 %v401, 7
        %404 = vset.pattern.permute.xlu0 %v402
        %405 = vperm.xlu0 %404, %v400
        %v406 = vpop.permute.xlu0 %405
        %v407 = vperm.slane %v398, 1
        %v408 = vlaneseq
        %v409 = vshrl.u32 %v408, 7
        %411 = vset.pattern.permute.xlu0 %v409
        %412 = vperm.xlu0 %411, %v407
        %v413 = vpop.permute.xlu0 %412
        %v416 = vmul.f32 %v394, %v406
        %v417 = vmul.f32 %v397, %v413
        %v418 = vld [vmem:[%s359] sm:$0x3]
        %v419 = vstv %s28
        %vm420 = vcmp.lt.s32.totalorder %v419, %v418
        %423 = vset.pattern.permute.xlu0 0
        %424 = vperm.xlu0 %423, %v416
        %v425 = vpop.permute.xlu0 %424
        %426 = vset.pattern.permute.xlu0 0
        %427 = vperm.xlu0 %426, %v417
        %v428 = vpop.permute.xlu0 %427
        %v429 = vlaneseq
        %v430 = vand.u32 %v429, 127
        %v431 = vperm.slane %v425, %v430
        %v432 = vperm.slane %v428, %v430
        %vm433 = vcmask 1041409
        %v434 = vsel %vm433, %v432, %v431
        %v436 = vsel %vm420, %v434, -inf
        %vm437 = vcmask 25600
        %438 = vst.msk [vmem:[%s370] sm:$0x3] %vm437, %v436
        %v439 = vld [vmem:[#allocation2] sm:$0x3]
        %v440 = vsel %vm437, %v436, -inf
        %441 = vmax.xlane.f32.xlu0 %v440
        %v442 = vpop.xlane.xlu0 %441
        %v443 = vmax.f32 %v439, %v442
        %v444 = vsub.f32 %v439, %v443
        %v445 = vmul.f32 %v444, 1.442695
        %v446 = vpow.pop %v445
        %448 = vset.pattern.permute.xlu0 0
        %449 = vperm.xlu0 %448, %v443
        %v450 = vpop.permute.xlu0 %449
        %v452 = vsub.f32 %v436, %v450
        %v453 = vmul.f32 %v452, 1.442695
        %v454 = vpow.pop %v453
        %v455 = vld [vmem:[#allocation3] sm:$0x3]
        %v456 = vmul.f32 %v446, %v455
        %v457 = vsel %vm437, %v454, 0.0
        %458 = vadd.xlane.f32.xlu0 %v457
        %v459 = vpop.xlane.xlu0 %458
        %v460 = vadd.f32 %v456, %v459
        %vm461 = vcmask 1024
        %462 = vst.msk [vmem:[#allocation3] sm:$0x3] %vm461, %v460
        %v463 = vld [vmem:[#allocation4] sm:$0x3]
        %465 = vset.pattern.permute.xlu0 0
        %466 = vperm.xlu0 %465, %v446
        %v467 = vpop.permute.xlu0 %466
        %v469 = vmul.f32 %v467, %v463
        %v470 = vperm.slane %v454, 0
        %v471 = vlaneseq
        %v472 = vshrl.u32 %v471, 7
        %474 = vset.pattern.permute.xlu0 %v472
        %475 = vperm.xlu0 %474, %v470
        %v476 = vpop.permute.xlu0 %475
        %v477 = vperm.slane %v454, 1
        %v478 = vlaneseq
        %v479 = vshrl.u32 %v478, 7
        %481 = vset.pattern.permute.xlu0 %v479
        %482 = vperm.xlu0 %481, %v477
        %v483 = vpop.permute.xlu0 %482
        %v484 = vmul.f32 %v476, %v380
        %v485 = vmul.f32 %v483, %v381
        %v486 = vsel %vm391, %v484, 0.0
        %v487 = vrot.slane %v486, 4
        %v488 = vadd.f32 %v486, %v487
        %v489 = vrot.slane %v488, 2
        %v490 = vadd.f32 %v488, %v489
        %v491 = vrot.slane %v490, 1
        %v492 = vadd.f32 %v490, %v491
        %v493 = vsel %vm391, %v485, 0.0
        %v494 = vrot.slane %v493, 4
        %v495 = vadd.f32 %v493, %v494
        %v496 = vrot.slane %v495, 2
        %v497 = vadd.f32 %v495, %v496
        %v498 = vrot.slane %v497, 1
        %v499 = vadd.f32 %v497, %v498
        %v502 = vsel %vm433, %v499, %v492
        %v504 = vadd.f32 %v469, %v502
        %vm505 = vcmask 254976
        %506 = vst.msk [vmem:[#allocation4] sm:$0x3] %vm505, %v504
        %507 = vst.msk [vmem:[#allocation2] sm:$0x3] %vm461, %v443
        %p508 = scmp.eq.s32.totalorder %s28, 7
        // Predicated region
        $region53: #{tpu_custom_call.1} parent=35 // pred_check
          %p509 = pneg %p508
        $region54: #{tpu_custom_call.1} parent=35 // pred_check_branch
          %511 = sbr.rel (%p509) target = $region56
        $region55: #{tpu_custom_call.1} parent=35 // pred_region
          %v512 = vld [vmem:[#allocation3] sm:$0x3]
          %v513 = vrcp.pop %v512
          %v514 = vld [vmem:[#allocation4] sm:$0x3]
          %516 = vset.pattern.permute.xlu0 0
          %517 = vperm.xlu0 %516, %v513
          %v518 = vpop.permute.xlu0 %517
          %v520 = vmul.f32 %v514, %v518
          %521 = vst.msk [vmem:[#allocation11] sm:$0x3] %vm505, %v520
          %v522 = vld [vmem:[#allocation2] sm:$0x3]
          %v523 = vld [vmem:[#allocation3] sm:$0x3]
          %v524 = vlog2.pop %v523
          %v525 = vmul.f32 %v524, 0.6931472
          %v526 = vadd.f32 %v522, %v525
          %527 = vst.msk [vmem:[%s363] sm:$0x3] %vm461, %v526
        $region56: #{tpu_custom_call.1} parent=35 // pred_fallthru
          _
        %p528 = scmp.lt.s32.totalorder %s27, 0
        %s529 = scalar_select %p528, %s27, 0
        %s530 = smul.addr %s529, 2
        %s531 = scalar_lea.vmem %s5, %s530
        %p532 = scmp.lt.s32.totalorder %s28, 7
        %s533 = scalar_select %p532, %s28, 7
        %p534 = scmp.lt.s32.totalorder %s27, 0
        %s535 = scalar_select %p534, %s27, 0
        %s536 = sadd.s32 %s535, %s533
        %s537 = smul.addr %s536, 2
        %s538 = scalar_lea.vmem %s6, %s537
        // Predicated region
        $region57: #{tpu_custom_call.1} parent=35 // pred_check
          %p539 = pneg %p159
        $region58: #{tpu_custom_call.1} parent=35 // pred_check_branch
          %541 = sbr.rel (%p539) target = $region60
        $region59: #{tpu_custom_call.1} parent=35 // pred_region
          %543 = vsyncadd [#allocation7], 0
          %s544 = smul.addr %s27, 2
          %s545 = scalar_lea.hbm %s4, %s544
          %s547 = sshll.u32 [#allocation11], 4
          %s548 = int_to_ptr.vmem [resolvable:$true] %s547
          %s549 = sshll.u32 %s545, 4
          %s550 = int_to_ptr.hbm [resolvable:$true] %s549
          %552 = dma.vmem_to_hbm [thread:$0]  %s548, 32, %s550, [#allocation7]
        $region60: #{tpu_custom_call.1} parent=35 // pred_fallthru
          _
        // Predicated region
        $region61: #{tpu_custom_call.1} parent=35 // pred_check
          %p553 = pneg %p185
        $region62: #{tpu_custom_call.1} parent=35 // pred_check_branch
          %555 = sbr.rel (%p553) target = $region64
        $region63: #{tpu_custom_call.1} parent=35 // pred_region
          _
        $region64: #{tpu_custom_call.1} parent=35 // pred_fallthru
          _
        // Predicated region
        $region65: #{tpu_custom_call.1} parent=35 // pred_check
          %p556 = pneg %p213
        $region66: #{tpu_custom_call.1} parent=35 // pred_check_branch
          %558 = sbr.rel (%p556) target = $region68
        $region67: #{tpu_custom_call.1} parent=35 // pred_region
          _
        $region68: #{tpu_custom_call.1} parent=35 // pred_fallthru
          _
        // Predicated region
        $region69: #{tpu_custom_call.1} parent=35 // pred_check
          %p559 = pneg %p159
        $region70: #{tpu_custom_call.1} parent=35 // pred_check_branch
          %561 = sbr.rel (%p559) target = $region72
        $region71: #{tpu_custom_call.1} parent=35 // pred_region
          %563 = dma.done [#allocation7], 32
        $region72: #{tpu_custom_call.1} parent=35 // pred_fallthru
          _
        // Predicated region
        $region73: #{tpu_custom_call.1} parent=35 // pred_check
          %p564 = pneg %p185
        $region74: #{tpu_custom_call.1} parent=35 // pred_check_branch
          %566 = sbr.rel (%p564) target = $region76
        $region75: #{tpu_custom_call.1} parent=35 // pred_region
          %p567 = scmp.lt.s32.totalorder %s27, 0
          %s568 = scalar_select %p567, %s27, 0
          %s569 = smul.addr %s568, 2
          %s570 = scalar_lea.vmem %s5, %s569
        $region76: #{tpu_custom_call.1} parent=35 // pred_fallthru
          _
      $region36: #{tpu_custom_call.1} parent=5 // pred_fallthru
        _
      %p571 = scmp.le.s32.totalorder 2, %s18
      // Predicated region
      $region77: #{tpu_custom_call.1} parent=5 // pred_check
        %p572 = pneg %p571
      $region78: #{tpu_custom_call.1} parent=5 // pred_check_branch
        %574 = sbr.rel (%p572) target = $region80
      $region79: #{tpu_custom_call.1} parent=5 // pred_region
        %s575 = ssub.s32 %s18, 2
        // Predicated region
        $region81: #{tpu_custom_call.1} parent=79 // pred_check
          %p576 = pneg %p219
        $region82: #{tpu_custom_call.1} parent=79 // pred_check_branch
          %578 = sbr.rel (%p576) target = $region84
        $region83: #{tpu_custom_call.1} parent=79 // pred_region
          %p579 = scmp.lt.s32.totalorder %s30, 7
          %s580 = scalar_select %p579, %s30, 7
          %p581 = scmp.lt.s32.totalorder %s29, 0
          %s582 = scalar_select %p581, %s29, 0
          %s583 = sadd.s32 %s582, %s580
          %s584 = smul.addr %s583, 2
          %s585 = scalar_lea.vmem %s6, %s584
        $region84: #{tpu_custom_call.1} parent=79 // pred_fallthru
          _
      $region80: #{tpu_custom_call.1} parent=5 // pred_fallthru
        _
    $region6: #{tpu_custom_call.1} parent=1 // loop_footer
      %s22 = sadd.s32 1, %s18
    $region7: #{tpu_custom_call.1} parent=1 // loop_footer_branch
      %17 = sbr.rel target = $region3
    $region8: #{tpu_custom_call.1} parent=1 // loop_exit
      _
    %586 = vsyncpa [#allocation6], 1
    %s587 = scalar_lea.sflag [#allocation6], 1
    %588 = vsyncpa %s587, 1
    %589 = vsyncpa [#allocation9], 1
    %s590 = scalar_lea.sflag [#allocation9], 1
    %591 = vsyncpa %s590, 1
    %592 = vsyncpa [#allocation7], 1
    %s593 = scalar_lea.sflag [#allocation7], 1
    %594 = vsyncpa %s593, 1

</llo_original>
